<compile_context>
chip_gen: v6e
topology: v6e:2x2x1
jax: 0.10.0
libtpu: 0.0.40
codegen_flags: <defaults>
</compile_context>

<pallas_src>
import functools

import jax
import jax.numpy as jnp
from jax.experimental import pallas as pl
from jax.experimental.pallas import tpu as pltpu

# ---------------------------------------------------------------------------
# Config (mirrors the PyTorch config object)
# ---------------------------------------------------------------------------
NON_LINEARITY = "gelu_new"
ADD_LN_BEFORE = True
ADD_LN_AFTER = True
LN_EPS = 1e-5  # torch.nn.functional.layer_norm default

LANE = 128
SUBLANE = 8


def _round_up(x, m):
    return (x + m - 1) // m * m


def _activation(x):
    """Matches transformers.activations.get_activation(NON_LINEARITY)."""
    if NON_LINEARITY == "relu":
        return jnp.maximum(x, 0.0)
    if NON_LINEARITY == "gelu_new":
        # 0.5 * x * (1 + tanh(sqrt(2/pi) * (x + 0.044715 * x^3)))
        c = 0.7978845608028654  # sqrt(2/pi)
        return 0.5 * x * (1.0 + jnp.tanh(c * (x + 0.044715 * x * x * x)))
    if NON_LINEARITY == "tanh":
        return jnp.tanh(x)
    raise ValueError(f"unsupported non_linearity: {NON_LINEARITY}")


def _layer_norm(x, w, b, d_real):
    """LayerNorm over the last dim, statistics over the first `d_real` lanes only.

    Padded lanes (if any) carry zero data and zero affine params, so they come
    out exactly zero and never perturb the statistics.
    """
    d_pad = x.shape[-1]
    if d_real == d_pad:
        mean = jnp.mean(x, axis=-1, keepdims=True)
        centered = x - mean
        var = jnp.mean(centered * centered, axis=-1, keepdims=True)
    else:
        lane = jax.lax.broadcasted_iota(jnp.int32, x.shape, x.ndim - 1)
        mask = lane < d_real
        inv_n = 1.0 / d_real
        mean = jnp.sum(jnp.where(mask, x, 0.0), axis=-1, keepdims=True) * inv_n
        centered_m = jnp.where(mask, x - mean, 0.0)
        var = jnp.sum(centered_m * centered_m, axis=-1, keepdims=True) * inv_n
        centered = x - mean  # padded lanes are zeroed by w == b == 0
    return centered * jax.lax.rsqrt(var + LN_EPS) * w + b


# ---------------------------------------------------------------------------
# Pallas kernel: one (tm, Dp) row-tile of the flattened input per grid step.
# All adapter weights are small, lane-dense, and VMEM-resident for every step.
# ---------------------------------------------------------------------------
def adapter_kernel(x_ref, pre_w_ref, pre_b_ref, wd_ref, bd_ref,
                   wu_ref, bu_ref, post_w_ref, post_b_ref, o_ref, *, d_real):
    x = x_ref[...].astype(jnp.float32)                          # (tm, Dp)

    z = _layer_norm(x, pre_w_ref[...], pre_b_ref[...], d_real) if ADD_LN_BEFORE else x

    # Matmul dtype follows the prepared weights (f32 default, bf16 optional).
    mm_dtype = wd_ref.dtype
    down = jnp.dot(z.astype(mm_dtype), wd_ref[...],
                   preferred_element_type=jnp.float32) + bd_ref[...]   # (tm, bnp)
    mid = _activation(down)                                            # f32 VPU/EUP math
    up = jnp.dot(mid.astype(mm_dtype), wu_ref[...],
                 preferred_element_type=jnp.float32) + bu_ref[...]     # (tm, Dp)

    if ADD_LN_AFTER:
        up = _layer_norm(up, post_w_ref[...], post_b_ref[...], d_real)

    o_ref[...] = (up + x).astype(o_ref.dtype)


# ---------------------------------------------------------------------------
# One-time parameter preparation (hoisted out of the forward path).
# ---------------------------------------------------------------------------
def prepare_adapter_params(params, *, matmul_dtype=jnp.float32):
    """Transpose F.linear weights to [in, out], zero-pad D / bottleneck to
    multiples of 128 (lane-dense), lift biases / LN params to (1, dim).
    Pass matmul_dtype=jnp.bfloat16 on v6e/v7x to halve weight HBM/VMEM traffic
    (LayerNorm / GELU math stays f32 inside the kernel)."""
    bn, D = params["down_w"].shape
    Dp, bnp = _round_up(D, LANE), _round_up(bn, LANE)

    def pad2(a, rows, cols):
        return jnp.pad(a, ((0, rows - a.shape[0]), (0, cols - a.shape[1])))

    def row(a, n):  # (k,) -> zero-padded (1, n) float32
        return jnp.pad(a, (0, n - a.shape[0])).reshape(1, n).astype(jnp.float32)

    return {
        "wd": pad2(jnp.transpose(params["down_w"]), Dp, bnp).astype(matmul_dtype),  # (Dp, bnp)
        "bd": row(params["down_b"], bnp),                                           # (1, bnp)
        "wu": pad2(jnp.transpose(params["up_w"]), bnp, Dp).astype(matmul_dtype),    # (bnp, Dp)
        "bu": row(params["up_b"], Dp),                                              # (1, Dp)
        "pre_w": row(params["pre_w"], Dp), "pre_b": row(params["pre_b"], Dp),
        "post_w": row(params["post_w"], Dp), "post_b": row(params["post_b"], Dp),
        "d_real": D, "bn_real": bn,
    }


def _pick_row_tile(M, Dp, bnp, act_itemsize, w_itemsize, tm_max, vmem_budget):
    """Largest row tile (multiple of 8, <= tm_max) whose buffers fit the budget."""
    # Weights are auto-pipelined with the default 2 buffers even though their
    # block index never changes; account for the 2x here instead of relying on
    # version-dependent single-buffering.
    weight_bytes = 2 * (2 * Dp * bnp * w_itemsize + (5 * Dp + bnp) * 4)
    tm = _round_up(min(tm_max, _round_up(M, SUBLANE)), SUBLANE)
    while tm > SUBLANE:
        act_bytes = 2 * 2 * tm * Dp * act_itemsize       # x/out tiles, double-buffered
        tmp_bytes = tm * (2 * Dp + 2 * bnp) * 4          # in-kernel f32 temporaries
        if act_bytes + tmp_bytes + weight_bytes + (4 << 20) <= vmem_budget:
            break
        tm //= 2
    return max(_round_up(tm, SUBLANE), SUBLANE)


# ---------------------------------------------------------------------------
# Forward wrapper
# ---------------------------------------------------------------------------
def meta_adapter_forward(x, prep, *, tm=512, vmem_budget_bytes=40 << 20):
    """x: [B, S, D]. prep: output of prepare_adapter_params for the same D."""
    B, S, D = x.shape
    assert prep["d_real"] == D, "prepared params were built for a different D"
    Dp, bnp = prep["wd"].shape
    M = B * S

    act_itemsize = jnp.dtype(x.dtype).itemsize
    w_itemsize = jnp.dtype(prep["wd"].dtype).itemsize
    tm_eff = _pick_row_tile(M, Dp, bnp, act_itemsize, w_itemsize, tm, vmem_budget_bytes)

    # Zero-pad rows (tail tile) and lanes (lane-dense D); padded rows/lanes are
    # mathematically inert and sliced off below.
    Mp = _round_up(M, tm_eff)
    x2d = x.reshape(M, D)
    if Mp != M or Dp != D:
        x2d = jnp.pad(x2d, ((0, Mp - M), (0, Dp - D)))

    grid = (Mp // tm_eff,)   # "parallel" -> shards across both TensorCores on v7x
    tile = lambda: pl.BlockSpec((tm_eff, Dp), lambda i: (i, 0))
    full = lambda shape: pl.BlockSpec(shape, lambda i: (0, 0))

    cost = pl.CostEstimate(
        flops=4 * M * D * prep["bn_real"],                 # two matmuls
        transcendentals=M * prep["bn_real"],               # tanh in gelu_new
        bytes_accessed=2 * M * D * act_itemsize + 2 * Dp * bnp * w_itemsize,
    )

    out2d = pl.pallas_call(
        functools.partial(adapter_kernel, d_real=D),
        out_shape=jax.ShapeDtypeStruct((Mp, Dp), x.dtype),
        grid_spec=pltpu.PrefetchScalarGridSpec(
            num_scalar_prefetch=0,
            grid=grid,
            in_specs=[
                tile(),                                    # x row tile
                full((1, Dp)), full((1, Dp)),              # pre-norm w, b
                full((Dp, bnp)), full((1, bnp)),           # down w, b
                full((bnp, Dp)), full((1, Dp)),            # up w, b
                full((1, Dp)), full((1, Dp)),              # post-norm w, b
            ],
            out_specs=tile(),
        ),
        compiler_params=pltpu.CompilerParams(
            dimension_semantics=("parallel",),
            vmem_limit_bytes=int(min(vmem_budget_bytes + (8 << 20), 48 << 20)),
        ),
        cost_estimate=cost,
    )(x2d, prep["pre_w"], prep["pre_b"], prep["wd"], prep["bd"],
      prep["wu"], prep["bu"], prep["post_w"], prep["post_b"])

    if Mp != M or Dp != D:
        out2d = out2d[:M, :D]
    return out2d.reshape(B, S, D)


# ---------------------------------------------------------------------------
# Pure-JAX reference (same math, no Pallas) for a sanity check.
# ---------------------------------------------------------------------------
def reference_forward(x, params):
    z = _layer_norm(x, params["pre_w"], params["pre_b"], x.shape[-1]) if ADD_LN_BEFORE else x
    down = z @ params["down_w"].T + params["down_b"]
    mid = _activation(down)
    up = mid @ params["up_w"].T + params["up_b"]
    if ADD_LN_AFTER:
        up = _layer_norm(up, params["post_w"], params["post_b"], x.shape[-1])
    return up + x


if __name__ == "__main__":
    B, S, D = 2, 8, 128        # batch, seq, adapter_input_dim (lane-dense D)
    BOTTLENECK = 64            # hyper-net bottleneck; padded to 128 internally

    key = jax.random.PRNGKey(0)
    keys = jax.random.split(key, 6)

    x = jax.random.normal(keys[0], (B, S, D), dtype=jnp.float32)

    # Deterministic synthetic adapter weights (shapes follow F.linear / LayerNorm).
    params = {
        "down_w": 0.1 * jax.random.normal(keys[1], (BOTTLENECK, D), jnp.float32),
        "down_b": 0.1 * jax.random.normal(keys[2], (BOTTLENECK,), jnp.float32),
        "up_w": 0.1 * jax.random.normal(keys[3], (D, BOTTLENECK), jnp.float32),
        "up_b": 0.1 * jax.random.normal(keys[4], (D,), jnp.float32),
        "pre_w": 1.0 + 0.05 * jax.random.normal(keys[5], (D,), jnp.float32),
        "pre_b": jnp.zeros((D,), jnp.float32),
        "post_w": jnp.ones((D,), jnp.float32),
        "post_b": jnp.zeros((D,), jnp.float32),
    }

    # One-time weight preparation (hoisted out of the per-call path).
    # For v6e/v7x bf16 storage: prepare_adapter_params(params, matmul_dtype=jnp.bfloat16)
    prep = prepare_adapter_params(params)

    out = jax.block_until_ready(meta_adapter_forward(x, prep))
    ref = reference_forward(x, params)

    assert out.shape == (B, S, D)
    assert jnp.allclose(out, ref, atol=2e-4, rtol=2e-4), (
        "mismatch vs reference, max|diff|=%s" % jnp.max(jnp.abs(out - ref)))

    print("KERNEL_OK")
</pallas_src>

<mosaic_0001>
module attributes {stable_mosaic.version = 11 : i64} {
  func.func @adapter_kernel(%arg0: i32, %arg1: memref<16x128xf32, #tpu.memory_space<vmem>>, %arg2: memref<1x128xf32, #tpu.memory_space<vmem>>, %arg3: memref<1x128xf32, #tpu.memory_space<vmem>>, %arg4: memref<128x128xf32, #tpu.memory_space<vmem>>, %arg5: memref<1x128xf32, #tpu.memory_space<vmem>>, %arg6: memref<128x128xf32, #tpu.memory_space<vmem>>, %arg7: memref<1x128xf32, #tpu.memory_space<vmem>>, %arg8: memref<1x128xf32, #tpu.memory_space<vmem>>, %arg9: memref<1x128xf32, #tpu.memory_space<vmem>>, %arg10: memref<16x128xf32, #tpu.memory_space<vmem>>) attributes {dimension_semantics = [#tpu.dimension_semantics<parallel>], iteration_bounds = array<i64: 1>, scalar_prefetch = 0 : i64, scratch_operands = 0 : i64, tpu.core_type = #tpu.core_type<tc>, window_params = [{transform_indices = @transform_0, window_bounds = array<i64: 16, 128>}, {pipeline_mode = #tpu.pipeline_mode<synchronous>, transform_indices = @transform_1, window_bounds = array<i64: 1, 128>}, {pipeline_mode = #tpu.pipeline_mode<synchronous>, transform_indices = @transform_2, window_bounds = array<i64: 1, 128>}, {pipeline_mode = #tpu.pipeline_mode<synchronous>, transform_indices = @transform_3, window_bounds = array<i64: 128, 128>}, {pipeline_mode = #tpu.pipeline_mode<synchronous>, transform_indices = @transform_4, window_bounds = array<i64: 1, 128>}, {pipeline_mode = #tpu.pipeline_mode<synchronous>, transform_indices = @transform_5, window_bounds = array<i64: 128, 128>}, {pipeline_mode = #tpu.pipeline_mode<synchronous>, transform_indices = @transform_6, window_bounds = array<i64: 1, 128>}, {pipeline_mode = #tpu.pipeline_mode<synchronous>, transform_indices = @transform_7, window_bounds = array<i64: 1, 128>}, {pipeline_mode = #tpu.pipeline_mode<synchronous>, transform_indices = @transform_8, window_bounds = array<i64: 1, 128>}, {transform_indices = @transform_9, window_bounds = array<i64: 16, 128>}]} {
    %c0 = arith.constant 0 : index
    %c0_0 = arith.constant 0 : index
    %0 = vector.load %arg1[%c0, %c0_0] : memref<16x128xf32, #tpu.memory_space<vmem>>, vector<16x128xf32>
    %c0_1 = arith.constant 0 : index
    %c0_2 = arith.constant 0 : index
    %1 = vector.load %arg2[%c0_1, %c0_2] : memref<1x128xf32, #tpu.memory_space<vmem>>, vector<1x128xf32>
    %c0_3 = arith.constant 0 : index
    %c0_4 = arith.constant 0 : index
    %2 = vector.load %arg3[%c0_3, %c0_4] : memref<1x128xf32, #tpu.memory_space<vmem>>, vector<1x128xf32>
    %cst = arith.constant dense<0.000000e+00> : vector<16xf32>
    %3 = vector.multi_reduction <add>, %0, %cst [1] : vector<16x128xf32> to vector<16xf32>
    %4 = vector.shape_cast %3 : vector<16xf32> to vector<16x1xf32>
    %cst_5 = arith.constant 1.280000e+02 : f32
    %5 = vector.broadcast %cst_5 : f32 to vector<16x1xf32>
    %6 = arith.divf %4, %5 : vector<16x1xf32>
    %7 = vector.broadcast %6 : vector<16x1xf32> to vector<16x128xf32>
    %8 = arith.subf %0, %7 : vector<16x128xf32>
    %9 = arith.mulf %8, %8 : vector<16x128xf32>
    %cst_6 = arith.constant dense<0.000000e+00> : vector<16xf32>
    %10 = vector.multi_reduction <add>, %9, %cst_6 [1] : vector<16x128xf32> to vector<16xf32>
    %11 = vector.shape_cast %10 : vector<16xf32> to vector<16x1xf32>
    %cst_7 = arith.constant 1.280000e+02 : f32
    %12 = vector.broadcast %cst_7 : f32 to vector<16x1xf32>
    %13 = arith.divf %11, %12 : vector<16x1xf32>
    %cst_8 = arith.constant 9.99999974E-6 : f32
    %14 = vector.broadcast %cst_8 : f32 to vector<16x1xf32>
    %15 = arith.addf %13, %14 : vector<16x1xf32>
    %16 = math.rsqrt %15 : vector<16x1xf32>
    %17 = vector.broadcast %16 : vector<16x1xf32> to vector<16x128xf32>
    %18 = arith.mulf %8, %17 : vector<16x128xf32>
    %19 = vector.broadcast %1 : vector<1x128xf32> to vector<16x128xf32>
    %20 = arith.mulf %18, %19 : vector<16x128xf32>
    %21 = vector.broadcast %2 : vector<1x128xf32> to vector<16x128xf32>
    %22 = arith.addf %20, %21 : vector<16x128xf32>
    %c0_9 = arith.constant 0 : index
    %c0_10 = arith.constant 0 : index
    %23 = vector.load %arg4[%c0_9, %c0_10] : memref<128x128xf32, #tpu.memory_space<vmem>>, vector<128x128xf32>
    %cst_11 = arith.constant dense<0.000000e+00> : vector<16x128xf32>
    %24 = tpu.matmul %22, %23, %cst_11 {dimension_numbers = #tpu.dot_dimension_numbers<[1], [0], [0], [1], [0, 0, 1, 1], [], []>} : vector<16x128xf32>, vector<128x128xf32>, vector<16x128xf32> -> vector<16x128xf32>
    %c0_12 = arith.constant 0 : index
    %c0_13 = arith.constant 0 : index
    %25 = vector.load %arg5[%c0_12, %c0_13] : memref<1x128xf32, #tpu.memory_space<vmem>>, vector<1x128xf32>
    %26 = vector.broadcast %25 : vector<1x128xf32> to vector<16x128xf32>
    %27 = arith.addf %24, %26 : vector<16x128xf32>
    %cst_14 = arith.constant 5.000000e-01 : f32
    %28 = vector.broadcast %cst_14 : f32 to vector<16x128xf32>
    %29 = arith.mulf %28, %27 : vector<16x128xf32>
    %cst_15 = arith.constant 4.471500e-02 : f32
    %30 = vector.broadcast %cst_15 : f32 to vector<16x128xf32>
    %31 = arith.mulf %30, %27 : vector<16x128xf32>
    %32 = arith.mulf %31, %27 : vector<16x128xf32>
    %33 = arith.mulf %32, %27 : vector<16x128xf32>
    %34 = arith.addf %27, %33 : vector<16x128xf32>
    %cst_16 = arith.constant 0.797884583 : f32
    %35 = vector.broadcast %cst_16 : f32 to vector<16x128xf32>
    %36 = arith.mulf %35, %34 : vector<16x128xf32>
    %37 = math.tanh %36 : vector<16x128xf32>
    %cst_17 = arith.constant 1.000000e+00 : f32
    %38 = vector.broadcast %cst_17 : f32 to vector<16x128xf32>
    %39 = arith.addf %38, %37 : vector<16x128xf32>
    %40 = arith.mulf %29, %39 : vector<16x128xf32>
    %c0_18 = arith.constant 0 : index
    %c0_19 = arith.constant 0 : index
    %41 = vector.load %arg6[%c0_18, %c0_19] : memref<128x128xf32, #tpu.memory_space<vmem>>, vector<128x128xf32>
    %cst_20 = arith.constant dense<0.000000e+00> : vector<16x128xf32>
    %42 = tpu.matmul %40, %41, %cst_20 {dimension_numbers = #tpu.dot_dimension_numbers<[1], [0], [0], [1], [0, 0, 1, 1], [], []>} : vector<16x128xf32>, vector<128x128xf32>, vector<16x128xf32> -> vector<16x128xf32>
    %c0_21 = arith.constant 0 : index
    %c0_22 = arith.constant 0 : index
    %43 = vector.load %arg7[%c0_21, %c0_22] : memref<1x128xf32, #tpu.memory_space<vmem>>, vector<1x128xf32>
    %44 = vector.broadcast %43 : vector<1x128xf32> to vector<16x128xf32>
    %45 = arith.addf %42, %44 : vector<16x128xf32>
    %c0_23 = arith.constant 0 : index
    %c0_24 = arith.constant 0 : index
    %46 = vector.load %arg8[%c0_23, %c0_24] : memref<1x128xf32, #tpu.memory_space<vmem>>, vector<1x128xf32>
    %c0_25 = arith.constant 0 : index
    %c0_26 = arith.constant 0 : index
    %47 = vector.load %arg9[%c0_25, %c0_26] : memref<1x128xf32, #tpu.memory_space<vmem>>, vector<1x128xf32>
    %cst_27 = arith.constant dense<0.000000e+00> : vector<16xf32>
    %48 = vector.multi_reduction <add>, %45, %cst_27 [1] : vector<16x128xf32> to vector<16xf32>
    %49 = vector.shape_cast %48 : vector<16xf32> to vector<16x1xf32>
    %cst_28 = arith.constant 1.280000e+02 : f32
    %50 = vector.broadcast %cst_28 : f32 to vector<16x1xf32>
    %51 = arith.divf %49, %50 : vector<16x1xf32>
    %52 = vector.broadcast %51 : vector<16x1xf32> to vector<16x128xf32>
    %53 = arith.subf %45, %52 : vector<16x128xf32>
    %54 = arith.mulf %53, %53 : vector<16x128xf32>
    %cst_29 = arith.constant dense<0.000000e+00> : vector<16xf32>
    %55 = vector.multi_reduction <add>, %54, %cst_29 [1] : vector<16x128xf32> to vector<16xf32>
    %56 = vector.shape_cast %55 : vector<16xf32> to vector<16x1xf32>
    %cst_30 = arith.constant 1.280000e+02 : f32
    %57 = vector.broadcast %cst_30 : f32 to vector<16x1xf32>
    %58 = arith.divf %56, %57 : vector<16x1xf32>
    %cst_31 = arith.constant 9.99999974E-6 : f32
    %59 = vector.broadcast %cst_31 : f32 to vector<16x1xf32>
    %60 = arith.addf %58, %59 : vector<16x1xf32>
    %61 = math.rsqrt %60 : vector<16x1xf32>
    %62 = vector.broadcast %61 : vector<16x1xf32> to vector<16x128xf32>
    %63 = arith.mulf %53, %62 : vector<16x128xf32>
    %64 = vector.broadcast %46 : vector<1x128xf32> to vector<16x128xf32>
    %65 = arith.mulf %63, %64 : vector<16x128xf32>
    %66 = vector.broadcast %47 : vector<1x128xf32> to vector<16x128xf32>
    %67 = arith.addf %65, %66 : vector<16x128xf32>
    %68 = arith.addf %67, %0 : vector<16x128xf32>
    %c0_32 = arith.constant 0 : index
    %c0_33 = arith.constant 0 : index
    %69 = vector.load %arg10[%c0_32, %c0_33] : memref<16x128xf32, #tpu.memory_space<vmem>>, vector<16x128xf32>
    tpu.vector_store %arg10[%c0_32, %c0_33], %68 {strides = array<i32>} : memref<16x128xf32, #tpu.memory_space<vmem>>, vector<16x128xf32>,
    return
  }
  func.func @transform_0(%arg0: i32) -> (i32, i32) {
    %c0_i32 = arith.constant 0 : i32
    %c0_i32_0 = arith.constant 0 : i32
    return %arg0, %c0_i32 : i32, i32
  }
  func.func @transform_1(%arg0: i32) -> (i32, i32) {
    %c0_i32 = arith.constant 0 : i32
    %c0_i32_0 = arith.constant 0 : i32
    %c0_i32_1 = arith.constant 0 : i32
    return %c0_i32, %c0_i32_0 : i32, i32
  }
  func.func @transform_2(%arg0: i32) -> (i32, i32) {
    %c0_i32 = arith.constant 0 : i32
    %c0_i32_0 = arith.constant 0 : i32
    %c0_i32_1 = arith.constant 0 : i32
    return %c0_i32, %c0_i32_0 : i32, i32
  }
  func.func @transform_3(%arg0: i32) -> (i32, i32) {
    %c0_i32 = arith.constant 0 : i32
    %c0_i32_0 = arith.constant 0 : i32
    %c0_i32_1 = arith.constant 0 : i32
    return %c0_i32, %c0_i32_0 : i32, i32
  }
  func.func @transform_4(%arg0: i32) -> (i32, i32) {
    %c0_i32 = arith.constant 0 : i32
    %c0_i32_0 = arith.constant 0 : i32
    %c0_i32_1 = arith.constant 0 : i32
    return %c0_i32, %c0_i32_0 : i32, i32
  }
  func.func @transform_5(%arg0: i32) -> (i32, i32) {
    %c0_i32 = arith.constant 0 : i32
    %c0_i32_0 = arith.constant 0 : i32
    %c0_i32_1 = arith.constant 0 : i32
    return %c0_i32, %c0_i32_0 : i32, i32
  }
  func.func @transform_6(%arg0: i32) -> (i32, i32) {
    %c0_i32 = arith.constant 0 : i32
    %c0_i32_0 = arith.constant 0 : i32
    %c0_i32_1 = arith.constant 0 : i32
    return %c0_i32, %c0_i32_0 : i32, i32
  }
  func.func @transform_7(%arg0: i32) -> (i32, i32) {
    %c0_i32 = arith.constant 0 : i32
    %c0_i32_0 = arith.constant 0 : i32
    %c0_i32_1 = arith.constant 0 : i32
    return %c0_i32, %c0_i32_0 : i32, i32
  }
  func.func @transform_8(%arg0: i32) -> (i32, i32) {
    %c0_i32 = arith.constant 0 : i32
    %c0_i32_0 = arith.constant 0 : i32
    %c0_i32_1 = arith.constant 0 : i32
    return %c0_i32, %c0_i32_0 : i32, i32
  }
  func.func @transform_9(%arg0: i32) -> (i32, i32) {
    %c0_i32 = arith.constant 0 : i32
    %c0_i32_0 = arith.constant 0 : i32
    return %arg0, %c0_i32 : i32, i32
  }
}

</mosaic_0001>

<llo_original>
// kernel: tpu_custom_call.1
$region0: #{tpu_custom_call.1}
  #allocation0 [shape = 'u32[]', space=smem, size = 0x4, offset = 0x4, fixed_abs, tag = 'smem constant byte address 0x4 - core index']
  #allocation1 [shape = 'u32[144,128]{1,0:T(1,128)}', space=vmem, size = 0x12000, scoped, tag = 'internal scratch']
  %s0 = inlined_call_operand.hbm [shape: f32[16,128], index: 0, kind: input, shape index: {}]
  %s1 = inlined_call_operand.vmem [shape: f32[1,128], index: 1, kind: input, shape index: {}]
  %s2 = inlined_call_operand.vmem [shape: f32[1,128], index: 2, kind: input, shape index: {}]
  %s3 = inlined_call_operand.hbm [shape: f32[128,128], index: 3, kind: input, shape index: {}]
  %s4 = inlined_call_operand.vmem [shape: f32[1,128], index: 4, kind: input, shape index: {}]
  %s5 = inlined_call_operand.hbm [shape: f32[128,128], index: 5, kind: input, shape index: {}]
  %s6 = inlined_call_operand.vmem [shape: f32[1,128], index: 6, kind: input, shape index: {}]
  %s7 = inlined_call_operand.vmem [shape: f32[1,128], index: 7, kind: input, shape index: {}]
  %s8 = inlined_call_operand.vmem [shape: f32[1,128], index: 8, kind: input, shape index: {}]
  %s9 = inlined_call_operand.hbm [shape: f32[16,128], index: 9, kind: output, shape index: {}]
  %s10 = sld [smem:[#allocation0]]
  $region58: #{tpu_custom_call.1} parent=0
    _
  %s12 = ssub.s32 1, %s10
  %s13 = scalar_select 0, %s12, %s10
  $region1: #{tpu_custom_call.1} parent=0
    #allocation2 [shape = 'u8[8192]{0}', space=vmem, size = 0x2000, scoped, tag = 'input window, operand 0, single buffered']
    #allocation3 [shape = 's32[1]{0}', space=sflag, size = 0x4, scoped, tag = 'scoped memory for tpu_custom_call.1']
    #allocation4 [shape = 's32[1]{0}', space=sflag, size = 0x4, scoped, tag = 'scoped memory for tpu_custom_call.1']
    #allocation5 [shape = 'u8[65536]{0}', space=vmem, size = 0x10000, scoped, tag = 'input window, operand 3, single buffered']
    #allocation6 [shape = 's32[1]{0}', space=sflag, size = 0x4, scoped, tag = 'scoped memory for tpu_custom_call.1']
    #allocation7 [shape = 'u8[65536]{0}', space=vmem, size = 0x10000, scoped, tag = 'input window, operand 5, single buffered']
    #allocation8 [shape = 'u8[8192]{0}', space=vmem, size = 0x2000, scoped, tag = 'output window, operand 0, single buffered']
    %14 = vsyncpa [#allocation3], 0
    %15 = vsyncpa [#allocation6], 0
    %16 = vsyncpa [#allocation4], 0
    // Predicated region
    $region2: #{tpu_custom_call.1} parent=1 // pred_check
      _
    $region3: #{tpu_custom_call.1} parent=1 // pred_check_branch
      %18 = sbr.rel (0) target = $region5
    $region4: #{tpu_custom_call.1} parent=1 // pred_region
      %s20 = ssub.s32 256, 256
      %21 = vsyncadd [#allocation3], %s20
      %s22 = sshll.u32 [#allocation2], 4
      %s23 = int_to_ptr.vmem [resolvable:$true] %s22
      %28 = dma.hbm_to_vmem [thread:$0]  %s0, 256, %s23, [#allocation3], 128, 128, 8
    $region5: #{tpu_custom_call.1} parent=1 // pred_fallthru
      _
    // Predicated region
    $region6: #{tpu_custom_call.1} parent=1 // pred_check
      _
    $region7: #{tpu_custom_call.1} parent=1 // pred_check_branch
      %30 = sbr.rel (0) target = $region9
    $region8: #{tpu_custom_call.1} parent=1 // pred_region
      _
    $region9: #{tpu_custom_call.1} parent=1 // pred_fallthru
      _
    // Predicated region
    $region10: #{tpu_custom_call.1} parent=1 // pred_check
      _
    $region11: #{tpu_custom_call.1} parent=1 // pred_check_branch
      %32 = sbr.rel (0) target = $region13
    $region12: #{tpu_custom_call.1} parent=1 // pred_region
      _
    $region13: #{tpu_custom_call.1} parent=1 // pred_fallthru
      _
    // Predicated region
    $region14: #{tpu_custom_call.1} parent=1 // pred_check
      _
    $region15: #{tpu_custom_call.1} parent=1 // pred_check_branch
      %34 = sbr.rel (0) target = $region17
    $region16: #{tpu_custom_call.1} parent=1 // pred_region
      %s36 = ssub.s32 2048, 2048
      %37 = vsyncadd [#allocation6], %s36
      %s38 = sshll.u32 [#allocation5], 4
      %s39 = int_to_ptr.vmem [resolvable:$true] %s38
      %44 = dma.hbm_to_vmem [thread:$0]  %s3, 2048, %s39, [#allocation6], 128, 128, 8
    $region17: #{tpu_custom_call.1} parent=1 // pred_fallthru
      _
    // Predicated region
    $region18: #{tpu_custom_call.1} parent=1 // pred_check
      _
    $region19: #{tpu_custom_call.1} parent=1 // pred_check_branch
      %46 = sbr.rel (0) target = $region21
    $region20: #{tpu_custom_call.1} parent=1 // pred_region
      _
    $region21: #{tpu_custom_call.1} parent=1 // pred_fallthru
      _
    // Predicated region
    $region22: #{tpu_custom_call.1} parent=1 // pred_check
      _
    $region23: #{tpu_custom_call.1} parent=1 // pred_check_branch
      %48 = sbr.rel (0) target = $region25
    $region24: #{tpu_custom_call.1} parent=1 // pred_region
      %s50 = ssub.s32 2048, 2048
      %51 = vsyncadd [#allocation6], %s50
      %s52 = sshll.u32 [#allocation7], 4
      %s53 = int_to_ptr.vmem [resolvable:$true] %s52
      %58 = dma.hbm_to_vmem [thread:$0]  %s5, 2048, %s53, [#allocation6], 128, 128, 8
    $region25: #{tpu_custom_call.1} parent=1 // pred_fallthru
      _
    // Predicated region
    $region26: #{tpu_custom_call.1} parent=1 // pred_check
      _
    $region27: #{tpu_custom_call.1} parent=1 // pred_check_branch
      %60 = sbr.rel (0) target = $region29
    $region28: #{tpu_custom_call.1} parent=1 // pred_region
      _
    $region29: #{tpu_custom_call.1} parent=1 // pred_fallthru
      _
    // Predicated region
    $region30: #{tpu_custom_call.1} parent=1 // pred_check
      _
    $region31: #{tpu_custom_call.1} parent=1 // pred_check_branch
      %62 = sbr.rel (0) target = $region33
    $region32: #{tpu_custom_call.1} parent=1 // pred_region
      _
    $region33: #{tpu_custom_call.1} parent=1 // pred_fallthru
      _
    // Predicated region
    $region34: #{tpu_custom_call.1} parent=1 // pred_check
      _
    $region35: #{tpu_custom_call.1} parent=1 // pred_check_branch
      %64 = sbr.rel (0) target = $region37
    $region36: #{tpu_custom_call.1} parent=1 // pred_region
      _
    $region37: #{tpu_custom_call.1} parent=1 // pred_fallthru
      _
    // Predicated region
    $region38: #{tpu_custom_call.1} parent=1 // pred_check
      _
    $region39: #{tpu_custom_call.1} parent=1 // pred_check_branch
      %66 = sbr.rel (0) target = $region41
    $region40: #{tpu_custom_call.1} parent=1 // pred_region
      %67 = dma.done [#allocation3], 256
    $region41: #{tpu_custom_call.1} parent=1 // pred_fallthru
      _
    // Predicated region
    $region42: #{tpu_custom_call.1} parent=1 // pred_check
      _
    $region43: #{tpu_custom_call.1} parent=1 // pred_check_branch
      %69 = sbr.rel (0) target = $region45
    $region44: #{tpu_custom_call.1} parent=1 // pred_region
      %70 = dma.done [#allocation6], 2048
    $region45: #{tpu_custom_call.1} parent=1 // pred_fallthru
      _
    // Predicated region
    $region46: #{tpu_custom_call.1} parent=1 // pred_check
      _
    $region47: #{tpu_custom_call.1} parent=1 // pred_check_branch
      %72 = sbr.rel (0) target = $region49
    $region48: #{tpu_custom_call.1} parent=1 // pred_region
      %73 = dma.done [#allocation6], 2048
    $region49: #{tpu_custom_call.1} parent=1 // pred_fallthru
      _
    %v74 = vld [vmem:[#allocation2] sm:$0xff]
    %v75 = vld [vmem:[#allocation2 + $0x8] sm:$0xff]
    %v76 = vld [vmem:[%s1] sm:$0x1]
    %v77 = vld [vmem:[%s2] sm:$0x1]
    %78 = vadd.xlane.f32.xlu0 %v74
    %v79 = vpop.xlane.xlu0 %78
    %80 = vadd.xlane.f32.xlu0 %v75
    %v81 = vpop.xlane.xlu0 %80
    %v82 = vrcp.pop 128.0
    %v83 = vmul.f32 %v79, %v82
    %v84 = vmul.f32 %v81, %v82
    %v85 = vsub.f32 %v74, %v83
    %v86 = vsub.f32 %v75, %v84
    %v87 = vmul.f32 %v85, %v85
    %v88 = vmul.f32 %v86, %v86
    %89 = vadd.xlane.f32.xlu0 %v87
    %v90 = vpop.xlane.xlu0 %89
    %91 = vadd.xlane.f32.xlu0 %v88
    %v92 = vpop.xlane.xlu0 %91
    %v93 = vmul.f32 %v90, %v82
    %v94 = vmul.f32 %v92, %v82
    %v95 = vadd.f32 %v93, 1e-05
    %v96 = vadd.f32 %v94, 1e-05
    %v97 = vrsqrt.pop %v95
    %v98 = vrsqrt.pop %v96
    %v99 = vmul.f32 %v85, %v97
    %v100 = vmul.f32 %v86, %v98
    %v102 = vlaneseq
    %v103 = vshrl.u32 %v102, 7
    %v104 = vsub.s32 0, %v103
    %v105 = vrot.slane %v76, %v104
    %v107 = vmul.f32 %v99, %v105
    %v108 = vmul.f32 %v100, %v105
    %v110 = vlaneseq
    %v111 = vshrl.u32 %v110, 7
    %v112 = vsub.s32 0, %v111
    %v113 = vrot.slane %v77, %v112
    %v115 = vadd.f32 %v107, %v113
    %v116 = vadd.f32 %v108, %v113
    %v117 = vld [vmem:[#allocation5] sm:$0xff]
    %v118 = vld [vmem:[#allocation5 + $0x8] sm:$0xff]
    %v119 = vld [vmem:[#allocation5 + $0x10] sm:$0xff]
    %v120 = vld [vmem:[#allocation5 + $0x18] sm:$0xff]
    %v121 = vld [vmem:[#allocation5 + $0x20] sm:$0xff]
    %v122 = vld [vmem:[#allocation5 + $0x28] sm:$0xff]
    %v123 = vld [vmem:[#allocation5 + $0x30] sm:$0xff]
    %v124 = vld [vmem:[#allocation5 + $0x38] sm:$0xff]
    %v125 = vld [vmem:[#allocation5 + $0x40] sm:$0xff]
    %v126 = vld [vmem:[#allocation5 + $0x48] sm:$0xff]
    %v127 = vld [vmem:[#allocation5 + $0x50] sm:$0xff]
    %v128 = vld [vmem:[#allocation5 + $0x58] sm:$0xff]
    %v129 = vld [vmem:[#allocation5 + $0x60] sm:$0xff]
    %v130 = vld [vmem:[#allocation5 + $0x68] sm:$0xff]
    %v131 = vld [vmem:[#allocation5 + $0x70] sm:$0xff]
    %v132 = vld [vmem:[#allocation5 + $0x78] sm:$0xff]
    %v133 = vld [vmem:[%s4] sm:$0x1]
    %v135 = vlaneseq
    %v136 = vshrl.u32 %v135, 7
    %v137 = vsub.s32 0, %v136
    %v138 = vrot.slane %v133, %v137
    %140 = vmatprep.subr.mxu0 0.0
    %141 = vmatpush1.msra.mxu0 %v132
    %142 = vmatprep.subr.mxu0 0.0
    %143 = vmatpush1.msra.mxu0 %v131
    %144 = vmatprep.subr.mxu0 0.0
    %145 = vmatpush1.msra.mxu0 %v130
    %146 = vmatprep.subr.mxu0 0.0
    %147 = vmatpush1.msra.mxu0 %v129
    %148 = vmatprep.subr.mxu0 0.0
    %149 = vmatpush1.msra.mxu0 %v128
    %150 = vmatprep.subr.mxu0 0.0
    %151 = vmatpush1.msra.mxu0 %v127
    %152 = vmatprep.subr.mxu0 0.0
    %153 = vmatpush1.msra.mxu0 %v126
    %154 = vmatprep.subr.mxu0 0.0
    %155 = vmatpush1.msra.mxu0 %v125
    %156 = vmatprep.subr.mxu0 0.0
    %157 = vmatpush1.msra.mxu0 %v124
    %158 = vmatprep.subr.mxu0 0.0
    %159 = vmatpush1.msra.mxu0 %v123
    %160 = vmatprep.subr.mxu0 0.0
    %161 = vmatpush1.msra.mxu0 %v122
    %162 = vmatprep.subr.mxu0 0.0
    %163 = vmatpush1.msra.mxu0 %v121
    %164 = vmatprep.subr.mxu0 0.0
    %165 = vmatpush1.msra.mxu0 %v120
    %166 = vmatprep.subr.mxu0 0.0
    %167 = vmatpush1.msra.mxu0 %v119
    %168 = vmatprep.subr.mxu0 0.0
    %169 = vmatpush1.msra.mxu0 %v118
    %170 = vmatprep.subr.mxu0 0.0
    %171 = vmatpush1.msra.mxu0 %v117
    %172 = vmatprep.subr.mxu0 0.0
    %173 = vmatpush2.msra.mxu0 0.0
    %174 = vmatprep.subr.mxu0 0.0
    %175 = vmatpush2.msra.mxu0 0.0
    %176 = vmatprep.subr.mxu0 0.0
    %177 = vmatpush2.msra.mxu0 0.0
    %178 = vmatprep.subr.mxu0 0.0
    %179 = vmatpush2.msra.mxu0 0.0
    %180 = vmatprep.subr.mxu0 0.0
    %181 = vmatpush2.msra.mxu0 0.0
    %182 = vmatprep.subr.mxu0 0.0
    %183 = vmatpush2.msra.mxu0 0.0
    %184 = vmatprep.subr.mxu0 0.0
    %185 = vmatpush2.msra.mxu0 0.0
    %186 = vmatprep.subr.mxu0 0.0
    %187 = vmatpush2.msra.mxu0 0.0
    %188 = vmatprep.subr.mxu0 0.0
    %189 = vmatpush2.msra.mxu0 0.0
    %190 = vmatprep.subr.mxu0 0.0
    %191 = vmatpush2.msra.mxu0 0.0
    %192 = vmatprep.subr.mxu0 0.0
    %193 = vmatpush2.msra.mxu0 0.0
    %194 = vmatprep.subr.mxu0 0.0
    %195 = vmatpush2.msra.mxu0 0.0
    %196 = vmatprep.subr.mxu0 0.0
    %197 = vmatpush2.msra.mxu0 0.0
    %198 = vmatprep.subr.mxu0 0.0
    %199 = vmatpush2.msra.mxu0 0.0
    %200 = vmatprep.subr.mxu0 0.0
    %201 = vmatpush2.msra.mxu0 0.0
    %202 = vmatprep.subr.mxu0 0.0
    %203 = vmatpush2.msra.mxu0 0.0
    %204 = vmatprep.mubr.f32.mxu0 0.0
    %205 = vmatmul.mubr.f32.gmra.mxu0 %v115
    %v206 = vpop.f32.mrf.mxu0
    %v207 = vadd.f32 %v138, %v206
    %v208 = vpop.f32.mrf.mxu0
    %209 = vmatprep.mubr.f32.mxu0 0.0
    %210 = vmatmul.mubr.f32.gmra.mxu0 %v116
    %v211 = vpop.f32.mrf.mxu0
    %v212 = vadd.f32 %v138, %v211
    %v213 = vpop.f32.mrf.mxu0
    %214 = vdwg.mxu0
    %v215 = vmul.f32 %v207, 0.5
    %v216 = vmul.f32 %v212, 0.5
    %v217 = vmul.f32 %v207, 0.044715
    %v218 = vmul.f32 %v212, 0.044715
    %v219 = vmul.f32 %v217, %v207
    %v220 = vmul.f32 %v218, %v212
    %v221 = vmul.f32 %v219, %v207
    %v222 = vmul.f32 %v220, %v212
    %v223 = vadd.f32 %v207, %v221
    %v224 = vadd.f32 %v212, %v222
    %v225 = vmul.f32 %v223, 0.7978846
    %v226 = vmul.f32 %v224, 0.7978846
    %v227 = vtanh.pop %v225
    %v228 = vtanh.pop %v226
    %v229 = vadd.f32 %v227, 1.0
    %v230 = vadd.f32 %v228, 1.0
    %v231 = vmul.f32 %v215, %v229
    %v232 = vmul.f32 %v216, %v230
    %v233 = vld [vmem:[#allocation7] sm:$0xff]
    %v234 = vld [vmem:[#allocation7 + $0x8] sm:$0xff]
    %v235 = vld [vmem:[#allocation7 + $0x10] sm:$0xff]
    %v236 = vld [vmem:[#allocation7 + $0x18] sm:$0xff]
    %v237 = vld [vmem:[#allocation7 + $0x20] sm:$0xff]
    %v238 = vld [vmem:[#allocation7 + $0x28] sm:$0xff]
    %v239 = vld [vmem:[#allocation7 + $0x30] sm:$0xff]
    %v240 = vld [vmem:[#allocation7 + $0x38] sm:$0xff]
    %v241 = vld [vmem:[#allocation7 + $0x40] sm:$0xff]
    %v242 = vld [vmem:[#allocation7 + $0x48] sm:$0xff]
    %v243 = vld [vmem:[#allocation7 + $0x50] sm:$0xff]
    %v244 = vld [vmem:[#allocation7 + $0x58] sm:$0xff]
    %v245 = vld [vmem:[#allocation7 + $0x60] sm:$0xff]
    %v246 = vld [vmem:[#allocation7 + $0x68] sm:$0xff]
    %v247 = vld [vmem:[#allocation7 + $0x70] sm:$0xff]
    %v248 = vld [vmem:[#allocation7 + $0x78] sm:$0xff]
    %v249 = vld [vmem:[%s6] sm:$0x1]
    %v251 = vlaneseq
    %v252 = vshrl.u32 %v251, 7
    %v253 = vsub.s32 0, %v252
    %v254 = vrot.slane %v249, %v253
    %256 = vmatprep.subr.mxu0 0.0
    %257 = vmatpush1.msra.mxu0 %v248
    %258 = vmatprep.subr.mxu0 0.0
    %259 = vmatpush1.msra.mxu0 %v247
    %260 = vmatprep.subr.mxu0 0.0
    %261 = vmatpush1.msra.mxu0 %v246
    %262 = vmatprep.subr.mxu0 0.0
    %263 = vmatpush1.msra.mxu0 %v245
    %264 = vmatprep.subr.mxu0 0.0
    %265 = vmatpush1.msra.mxu0 %v244
    %266 = vmatprep.subr.mxu0 0.0
    %267 = vmatpush1.msra.mxu0 %v243
    %268 = vmatprep.subr.mxu0 0.0
    %269 = vmatpush1.msra.mxu0 %v242
    %270 = vmatprep.subr.mxu0 0.0
    %271 = vmatpush1.msra.mxu0 %v241
    %272 = vmatprep.subr.mxu0 0.0
    %273 = vmatpush1.msra.mxu0 %v240
    %274 = vmatprep.subr.mxu0 0.0
    %275 = vmatpush1.msra.mxu0 %v239
    %276 = vmatprep.subr.mxu0 0.0
    %277 = vmatpush1.msra.mxu0 %v238
    %278 = vmatprep.subr.mxu0 0.0
    %279 = vmatpush1.msra.mxu0 %v237
    %280 = vmatprep.subr.mxu0 0.0
    %281 = vmatpush1.msra.mxu0 %v236
    %282 = vmatprep.subr.mxu0 0.0
    %283 = vmatpush1.msra.mxu0 %v235
    %284 = vmatprep.subr.mxu0 0.0
    %285 = vmatpush1.msra.mxu0 %v234
    %286 = vmatprep.subr.mxu0 0.0
    %287 = vmatpush1.msra.mxu0 %v233
    %288 = vmatprep.subr.mxu0 0.0
    %289 = vmatpush2.msra.mxu0 0.0
    %290 = vmatprep.subr.mxu0 0.0
    %291 = vmatpush2.msra.mxu0 0.0
    %292 = vmatprep.subr.mxu0 0.0
    %293 = vmatpush2.msra.mxu0 0.0
    %294 = vmatprep.subr.mxu0 0.0
    %295 = vmatpush2.msra.mxu0 0.0
    %296 = vmatprep.subr.mxu0 0.0
    %297 = vmatpush2.msra.mxu0 0.0
    %298 = vmatprep.subr.mxu0 0.0
    %299 = vmatpush2.msra.mxu0 0.0
    %300 = vmatprep.subr.mxu0 0.0
    %301 = vmatpush2.msra.mxu0 0.0
    %302 = vmatprep.subr.mxu0 0.0
    %303 = vmatpush2.msra.mxu0 0.0
    %304 = vmatprep.subr.mxu0 0.0
    %305 = vmatpush2.msra.mxu0 0.0
    %306 = vmatprep.subr.mxu0 0.0
    %307 = vmatpush2.msra.mxu0 0.0
    %308 = vmatprep.subr.mxu0 0.0
    %309 = vmatpush2.msra.mxu0 0.0
    %310 = vmatprep.subr.mxu0 0.0
    %311 = vmatpush2.msra.mxu0 0.0
    %312 = vmatprep.subr.mxu0 0.0
    %313 = vmatpush2.msra.mxu0 0.0
    %314 = vmatprep.subr.mxu0 0.0
    %315 = vmatpush2.msra.mxu0 0.0
    %316 = vmatprep.subr.mxu0 0.0
    %317 = vmatpush2.msra.mxu0 0.0
    %318 = vmatprep.subr.mxu0 0.0
    %319 = vmatpush2.msra.mxu0 0.0
    %320 = vmatprep.mubr.f32.mxu0 0.0
    %321 = vmatmul.mubr.f32.gmra.mxu0 %v231
    %v322 = vpop.f32.mrf.mxu0
    %v323 = vadd.f32 %v254, %v322
    %v324 = vpop.f32.mrf.mxu0
    %325 = vmatprep.mubr.f32.mxu0 0.0
    %326 = vmatmul.mubr.f32.gmra.mxu0 %v232
    %v327 = vpop.f32.mrf.mxu0
    %v328 = vadd.f32 %v254, %v327
    %v329 = vpop.f32.mrf.mxu0
    %330 = vdwg.mxu0
    %v331 = vld [vmem:[%s7] sm:$0x1]
    %v332 = vld [vmem:[%s8] sm:$0x1]
    %333 = vadd.xlane.f32.xlu0 %v323
    %v334 = vpop.xlane.xlu0 %333
    %335 = vadd.xlane.f32.xlu0 %v328
    %v336 = vpop.xlane.xlu0 %335
    %v337 = vmul.f32 %v334, %v82
    %v338 = vmul.f32 %v336, %v82
    %v339 = vsub.f32 %v323, %v337
    %v340 = vsub.f32 %v328, %v338
    %v341 = vmul.f32 %v339, %v339
    %v342 = vmul.f32 %v340, %v340
    %343 = vadd.xlane.f32.xlu0 %v341
    %v344 = vpop.xlane.xlu0 %343
    %345 = vadd.xlane.f32.xlu0 %v342
    %v346 = vpop.xlane.xlu0 %345
    %v347 = vmul.f32 %v344, %v82
    %v348 = vmul.f32 %v346, %v82
    %v349 = vadd.f32 %v347, 1e-05
    %v350 = vadd.f32 %v348, 1e-05
    %v351 = vrsqrt.pop %v349
    %v352 = vrsqrt.pop %v350
    %v353 = vmul.f32 %v339, %v351
    %v354 = vmul.f32 %v340, %v352
    %v356 = vlaneseq
    %v357 = vshrl.u32 %v356, 7
    %v358 = vsub.s32 0, %v357
    %v359 = vrot.slane %v331, %v358
    %v361 = vmul.f32 %v353, %v359
    %v362 = vmul.f32 %v354, %v359
    %v364 = vlaneseq
    %v365 = vshrl.u32 %v364, 7
    %v366 = vsub.s32 0, %v365
    %v367 = vrot.slane %v332, %v366
    %v369 = vadd.f32 %v361, %v367
    %v370 = vadd.f32 %v362, %v367
    %v371 = vadd.f32 %v369, %v74
    %v372 = vadd.f32 %v370, %v75
    %373 = vst [vmem:[#allocation8] sm:$0xff] %v371
    %374 = vst [vmem:[#allocation8 + $0x8] sm:$0xff] %v372
    // Predicated region
    $region50: #{tpu_custom_call.1} parent=1 // pred_check
      _
    $region51: #{tpu_custom_call.1} parent=1 // pred_check_branch
      %376 = sbr.rel (0) target = $region53
    $region52: #{tpu_custom_call.1} parent=1 // pred_region
      %s378 = ssub.s32 256, 256
      %379 = vsyncadd [#allocation4], %s378
      %s380 = sshll.u32 [#allocation8], 4
      %s381 = int_to_ptr.vmem [resolvable:$true] %s380
      %386 = dma.vmem_to_hbm [thread:$0]  %s381, 256, %s9, [#allocation4], 128, 128, 8
    $region53: #{tpu_custom_call.1} parent=1 // pred_fallthru
      _
    // Predicated region
    $region54: #{tpu_custom_call.1} parent=1 // pred_check
      _
    $region55: #{tpu_custom_call.1} parent=1 // pred_check_branch
      %388 = sbr.rel (0) target = $region57
    $region56: #{tpu_custom_call.1} parent=1 // pred_region
      %389 = dma.done [#allocation4], 256
    $region57: #{tpu_custom_call.1} parent=1 // pred_fallthru
      _
    %390 = vsyncpa [#allocation3], 1
    %391 = vsyncpa [#allocation6], 1
    %392 = vsyncpa [#allocation4], 1

</llo_original>
